<compile_context>
chip_gen: v7x
topology: tpu7x:2x2x1
jax: 0.10.0
libtpu: 0.0.40
codegen_flags: <defaults>
</compile_context>

<pallas_src>
import functools

import jax
import jax.numpy as jnp
from jax.experimental import pallas as pl
from jax.experimental.pallas import tpu as pltpu

# (in_features, out_features) per effective layer
LAYER_DIMS = [(8 * 3, 50), (50, 50), (50, 45), (45, 40), (40, 35), (35, 20)]
N_IN = LAYER_DIMS[0][0]    # 24
N_OUT = LAYER_DIMS[-1][1]  # 20


def _round_up(n, m):
    return ((n + m - 1) // m) * m


def _mlp_kernel(x_ref, *refs):
    """Fused 6-layer MLP on one (TR, p*24) lane-packed batch tile."""
    # refs = (w1, b1, w2, b2, ..., w6, b6, out_ref)
    out_ref = refs[-1]
    param_refs = refs[:-1]
    n_layers = len(param_refs) // 2

    h = x_ref[...]                                   # (TR, p*24) bf16
    for layer in range(n_layers):
        w = param_refs[2 * layer][...]               # (p*in, p*out) bf16 block-diag
        b = param_refs[2 * layer + 1][...]           # (1, p*out)  f32 or bf16
        # bf16 x bf16 -> f32 accumulation on the MXU.
        acc = jnp.dot(h, w, preferred_element_type=jnp.float32)
        # Bias + ReLU in the bias dtype (f32 epilogue on v5e, bf16 on v6e/v7x).
        h = jnp.maximum(acc.astype(b.dtype) + b, 0)
        if layer < n_layers - 1:
            h = h.astype(jnp.bfloat16)               # MXU-native input for next layer
    out_ref[...] = h.astype(out_ref.dtype)           # ReLU also applied to the last layer


def pack_params(params, pack, bias_dtype=jnp.float32):
    """Block-diagonalize weights and tile biases for lane packing.

    params: list of (W (in, out) f32, b (out,) f32) master parameters.
    Returns flat list [W1p, b1p, ..., W6p, b6p] with
      Wkp = blockdiag(Wk, ..., Wk)  shape (pack*in, pack*out), bf16
      bkp = tile(bk, pack)          shape (1, pack*out),       bias_dtype
    """
    eye = jnp.eye(pack, dtype=jnp.float32)
    flat = []
    for w, b in params:
        fi, fo = w.shape
        wp = jnp.kron(eye, w.astype(jnp.float32)).astype(jnp.bfloat16)
        bp = jnp.tile(jnp.reshape(b, (1, fo)), (1, pack)).astype(bias_dtype)
        flat.append(wp)
        flat.append(bp)
    return flat


@functools.partial(jax.jit, static_argnames=("tile_rows",))
def dlcm_hex_8_7_forward(x, packed_params, *, tile_rows=1024):
    """x: (B, 24) f32 (or (B, 8, 3)).  packed_params: output of pack_params()."""
    if x.ndim > 2:
        x = x.reshape(x.shape[0], -1)
    batch = x.shape[0]
    pack = packed_params[0].shape[0] // N_IN          # packing factor p
    in_w = pack * N_IN                                # packed input lane width
    out_w = pack * N_OUT                              # packed output lane width

    # ---- choose the packed-row tile --------------------------------------
    rows = pl.cdiv(batch, pack)
    if rows <= tile_rows:
        if rows >= 16:
            # Split into >= 2 grid steps so both v7x TensorCores get work.
            tr = _round_up(pl.cdiv(rows, 2), 8)
        else:
            tr = rows                                 # single tiny full-array block
    else:
        assert tile_rows % 8 == 0, "tile_rows must be a multiple of 8 sublanes"
        tr = tile_rows
    padded_rows = _round_up(rows, tr)
    padded_batch = padded_rows * pack

    # ---- lane-pack the batch: (B,24) f32 -> (rows, p*24) bf16 -------------
    # (Padded rows produce relu(bias) != 0 but are sliced off below; the
    #  kernel never aliases/accumulates into a pre-existing buffer.)
    x_bf = x.astype(jnp.bfloat16)
    if padded_batch != batch:
        x_bf = jnp.pad(x_bf, ((0, padded_batch - batch), (0, 0)))
    x_packed = x_bf.reshape(padded_rows, in_w)        # free view of contiguous rows

    grid = (padded_rows // tr,)
    x_spec = pl.BlockSpec((tr, in_w), lambda i: (i, 0))
    out_spec = pl.BlockSpec((tr, out_w), lambda i: (i, 0))
    # Full-array blocks + constant block index -> params DMA'd once, resident.
    param_specs = [pl.BlockSpec(arr.shape, lambda i: (0, 0)) for arr in packed_params]

    flops = 2 * padded_batch * sum(fi * fo for fi, fo in LAYER_DIMS)
    param_bytes = sum(int(arr.size) * arr.dtype.itemsize for arr in packed_params)
    bytes_accessed = padded_batch * N_IN * 2 + padded_batch * N_OUT * 4 + param_bytes

    out_packed = pl.pallas_call(
        _mlp_kernel,
        out_shape=jax.ShapeDtypeStruct((padded_rows, out_w), jnp.float32),
        grid=grid,
        in_specs=[x_spec] + param_specs,
        out_specs=out_spec,
        compiler_params=pltpu.CompilerParams(
            dimension_semantics=("parallel",),        # megacore-shard the batch axis
        ),
        cost_estimate=pl.CostEstimate(
            flops=flops, transcendentals=0, bytes_accessed=bytes_accessed),
    )(x_packed, *packed_params)

    # Un-pack: (rows, p*20) -> (padded_B, 20) -> (B, 20)
    return out_packed.reshape(padded_batch, N_OUT)[:batch]


def init_params(key):
    """PyTorch nn.Linear-style init: U[-1/sqrt(fan_in), 1/sqrt(fan_in)], f32 master copy."""
    params = []
    for fan_in, fan_out in LAYER_DIMS:
        key, kw, kb = jax.random.split(key, 3)
        bound = 1.0 / float(fan_in) ** 0.5
        w = jax.random.uniform(kw, (fan_in, fan_out), jnp.float32, -bound, bound)
        b = jax.random.uniform(kb, (fan_out,), jnp.float32, -bound, bound)
        params.append((w, b))
    return params


def reference_forward_f32(x, params):
    """Pure-f32 reference matching the PyTorch module's math."""
    if x.ndim > 2:
        x = x.reshape(x.shape[0], -1)
    h = x
    for w, b in params:
        h = jnp.maximum(h @ w + b[None, :], 0.0)
    return h


def reference_forward_mirrored(x, params, bias_dtype=jnp.float32):
    """Reference mirroring the kernel's dtype policy (bf16 MXU inputs, chosen epilogue)."""
    if x.ndim > 2:
        x = x.reshape(x.shape[0], -1)
    h = x.astype(jnp.bfloat16)
    for i, (w, b) in enumerate(params):
        acc = jnp.dot(h, w.astype(jnp.bfloat16), preferred_element_type=jnp.float32)
        h = jnp.maximum(acc.astype(bias_dtype) + b[None, :].astype(bias_dtype), 0)
        if i < len(params) - 1:
            h = h.astype(jnp.bfloat16)
    return h.astype(jnp.float32)


if __name__ == "__main__":
    key = jax.random.PRNGKey(0)
    key, kx1, kx2 = jax.random.split(key, 3)
    params = init_params(key)

    PACK = 5  # 5*50 <= 256 MXU lanes (v6e/v7x).  TODO(synk): use PACK=2 on v5e (128-wide MXU).

    # ---- small batch, f32 epilogue (safe on all chips incl. v5e) ----------
    packed_f32 = pack_params(params, PACK, bias_dtype=jnp.float32)
    x1 = jax.random.normal(kx1, (8, N_IN), jnp.float32)
    out1 = jax.block_until_ready(dlcm_hex_8_7_forward(x1, packed_f32))
    assert out1.shape == (8, N_OUT), out1.shape
    ref1 = reference_forward_mirrored(x1, params, jnp.float32)
    ref1_f32 = reference_forward_f32(x1, params)
    assert jnp.allclose(out1, ref1, atol=1e-2, rtol=1e-2), "mismatch vs mirrored ref (small)"
    assert jnp.allclose(out1, ref1_f32, atol=3e-2, rtol=3e-2), "mismatch vs f32 ref (small)"

    # ---- larger batch, bf16 epilogue (v6e/v7x), multi-step tiled grid -----
    packed_bf16 = pack_params(params, PACK, bias_dtype=jnp.bfloat16)
    x2 = jax.random.normal(kx2, (400, N_IN), jnp.float32)
    out2 = jax.block_until_ready(dlcm_hex_8_7_forward(x2, packed_bf16, tile_rows=32))
    assert out2.shape == (400, N_OUT), out2.shape
    ref2 = reference_forward_mirrored(x2, params, jnp.bfloat16)
    ref2_f32 = reference_forward_f32(x2, params)
    assert jnp.allclose(out2, ref2, atol=3e-2, rtol=3e-2), "mismatch vs mirrored ref (tiled)"
    assert jnp.allclose(out2, ref2_f32, atol=6e-2, rtol=6e-2), "mismatch vs f32 ref (tiled)"

    print("KERNEL_OK")
</pallas_src>

<mosaic_0001>
module attributes {stable_mosaic.version = 11 : i64} {
  func.func @_mlp_kernel(%arg0: i32, %arg1: memref<2x120xbf16, #tpu.memory_space<vmem>>, %arg2: memref<120x250xbf16, #tpu.memory_space<vmem>>, %arg3: memref<1x250xf32, #tpu.memory_space<vmem>>, %arg4: memref<250x250xbf16, #tpu.memory_space<vmem>>, %arg5: memref<1x250xf32, #tpu.memory_space<vmem>>, %arg6: memref<250x225xbf16, #tpu.memory_space<vmem>>, %arg7: memref<1x225xf32, #tpu.memory_space<vmem>>, %arg8: memref<225x200xbf16, #tpu.memory_space<vmem>>, %arg9: memref<1x200xf32, #tpu.memory_space<vmem>>, %arg10: memref<200x175xbf16, #tpu.memory_space<vmem>>, %arg11: memref<1x175xf32, #tpu.memory_space<vmem>>, %arg12: memref<175x100xbf16, #tpu.memory_space<vmem>>, %arg13: memref<1x100xf32, #tpu.memory_space<vmem>>, %arg14: memref<2x100xf32, #tpu.memory_space<vmem>>) attributes {dimension_semantics = [#tpu.dimension_semantics<parallel>], iteration_bounds = array<i64: 1>, scalar_prefetch = 0 : i64, scratch_operands = 0 : i64, tpu.core_type = #tpu.core_type<tc>, window_params = [{transform_indices = @transform_0, window_bounds = array<i64: 2, 120>}, {pipeline_mode = #tpu.pipeline_mode<synchronous>, transform_indices = @transform_1, window_bounds = array<i64: 120, 250>}, {pipeline_mode = #tpu.pipeline_mode<synchronous>, transform_indices = @transform_2, window_bounds = array<i64: 1, 250>}, {pipeline_mode = #tpu.pipeline_mode<synchronous>, transform_indices = @transform_3, window_bounds = array<i64: 250, 250>}, {pipeline_mode = #tpu.pipeline_mode<synchronous>, transform_indices = @transform_4, window_bounds = array<i64: 1, 250>}, {pipeline_mode = #tpu.pipeline_mode<synchronous>, transform_indices = @transform_5, window_bounds = array<i64: 250, 225>}, {pipeline_mode = #tpu.pipeline_mode<synchronous>, transform_indices = @transform_6, window_bounds = array<i64: 1, 225>}, {pipeline_mode = #tpu.pipeline_mode<synchronous>, transform_indices = @transform_7, window_bounds = array<i64: 225, 200>}, {pipeline_mode = #tpu.pipeline_mode<synchronous>, transform_indices = @transform_8, window_bounds = array<i64: 1, 200>}, {pipeline_mode = #tpu.pipeline_mode<synchronous>, transform_indices = @transform_9, window_bounds = array<i64: 200, 175>}, {pipeline_mode = #tpu.pipeline_mode<synchronous>, transform_indices = @transform_10, window_bounds = array<i64: 1, 175>}, {pipeline_mode = #tpu.pipeline_mode<synchronous>, transform_indices = @transform_11, window_bounds = array<i64: 175, 100>}, {pipeline_mode = #tpu.pipeline_mode<synchronous>, transform_indices = @transform_12, window_bounds = array<i64: 1, 100>}, {transform_indices = @transform_13, window_bounds = array<i64: 2, 100>}]} {
    %c0 = arith.constant 0 : index
    %c0_0 = arith.constant 0 : index
    %0 = vector.load %arg1[%c0, %c0_0] : memref<2x120xbf16, #tpu.memory_space<vmem>>, vector<2x120xbf16>
    %c0_1 = arith.constant 0 : index
    %c0_2 = arith.constant 0 : index
    %1 = vector.load %arg2[%c0_1, %c0_2] : memref<120x250xbf16, #tpu.memory_space<vmem>>, vector<120x250xbf16>
    %c0_3 = arith.constant 0 : index
    %c0_4 = arith.constant 0 : index
    %2 = vector.load %arg3[%c0_3, %c0_4] : memref<1x250xf32, #tpu.memory_space<vmem>>, vector<1x250xf32>
    %cst = arith.constant dense<0.000000e+00> : vector<2x250xf32>
    %3 = tpu.matmul %0, %1, %cst {dimension_numbers = #tpu.dot_dimension_numbers<[1], [0], [0], [1], [0, 0, 1, 1], [], []>} : vector<2x120xbf16>, vector<120x250xbf16>, vector<2x250xf32> -> vector<2x250xf32>
    %4 = vector.broadcast %2 : vector<1x250xf32> to vector<2x250xf32>
    %5 = arith.addf %3, %4 : vector<2x250xf32>
    %cst_5 = arith.constant 0.000000e+00 : f32
    %6 = vector.broadcast %cst_5 : f32 to vector<2x250xf32>
    %7 = arith.maximumf %5, %6 : vector<2x250xf32>
    %8 = arith.truncf %7 : vector<2x250xf32> to vector<2x250xbf16>
    %c0_6 = arith.constant 0 : index
    %c0_7 = arith.constant 0 : index
    %9 = vector.load %arg4[%c0_6, %c0_7] : memref<250x250xbf16, #tpu.memory_space<vmem>>, vector<250x250xbf16>
    %c0_8 = arith.constant 0 : index
    %c0_9 = arith.constant 0 : index
    %10 = vector.load %arg5[%c0_8, %c0_9] : memref<1x250xf32, #tpu.memory_space<vmem>>, vector<1x250xf32>
    %cst_10 = arith.constant dense<0.000000e+00> : vector<2x250xf32>
    %11 = tpu.matmul %8, %9, %cst_10 {dimension_numbers = #tpu.dot_dimension_numbers<[1], [0], [0], [1], [0, 0, 1, 1], [], []>} : vector<2x250xbf16>, vector<250x250xbf16>, vector<2x250xf32> -> vector<2x250xf32>
    %12 = vector.broadcast %10 : vector<1x250xf32> to vector<2x250xf32>
    %13 = arith.addf %11, %12 : vector<2x250xf32>
    %cst_11 = arith.constant 0.000000e+00 : f32
    %14 = vector.broadcast %cst_11 : f32 to vector<2x250xf32>
    %15 = arith.maximumf %13, %14 : vector<2x250xf32>
    %16 = arith.truncf %15 : vector<2x250xf32> to vector<2x250xbf16>
    %c0_12 = arith.constant 0 : index
    %c0_13 = arith.constant 0 : index
    %17 = vector.load %arg6[%c0_12, %c0_13] : memref<250x225xbf16, #tpu.memory_space<vmem>>, vector<250x225xbf16>
    %c0_14 = arith.constant 0 : index
    %c0_15 = arith.constant 0 : index
    %18 = vector.load %arg7[%c0_14, %c0_15] : memref<1x225xf32, #tpu.memory_space<vmem>>, vector<1x225xf32>
    %cst_16 = arith.constant dense<0.000000e+00> : vector<2x225xf32>
    %19 = tpu.matmul %16, %17, %cst_16 {dimension_numbers = #tpu.dot_dimension_numbers<[1], [0], [0], [1], [0, 0, 1, 1], [], []>} : vector<2x250xbf16>, vector<250x225xbf16>, vector<2x225xf32> -> vector<2x225xf32>
    %20 = vector.broadcast %18 : vector<1x225xf32> to vector<2x225xf32>
    %21 = arith.addf %19, %20 : vector<2x225xf32>
    %cst_17 = arith.constant 0.000000e+00 : f32
    %22 = vector.broadcast %cst_17 : f32 to vector<2x225xf32>
    %23 = arith.maximumf %21, %22 : vector<2x225xf32>
    %24 = arith.truncf %23 : vector<2x225xf32> to vector<2x225xbf16>
    %c0_18 = arith.constant 0 : index
    %c0_19 = arith.constant 0 : index
    %25 = vector.load %arg8[%c0_18, %c0_19] : memref<225x200xbf16, #tpu.memory_space<vmem>>, vector<225x200xbf16>
    %c0_20 = arith.constant 0 : index
    %c0_21 = arith.constant 0 : index
    %26 = vector.load %arg9[%c0_20, %c0_21] : memref<1x200xf32, #tpu.memory_space<vmem>>, vector<1x200xf32>
    %cst_22 = arith.constant dense<0.000000e+00> : vector<2x200xf32>
    %27 = tpu.matmul %24, %25, %cst_22 {dimension_numbers = #tpu.dot_dimension_numbers<[1], [0], [0], [1], [0, 0, 1, 1], [], []>} : vector<2x225xbf16>, vector<225x200xbf16>, vector<2x200xf32> -> vector<2x200xf32>
    %28 = vector.broadcast %26 : vector<1x200xf32> to vector<2x200xf32>
    %29 = arith.addf %27, %28 : vector<2x200xf32>
    %cst_23 = arith.constant 0.000000e+00 : f32
    %30 = vector.broadcast %cst_23 : f32 to vector<2x200xf32>
    %31 = arith.maximumf %29, %30 : vector<2x200xf32>
    %32 = arith.truncf %31 : vector<2x200xf32> to vector<2x200xbf16>
    %c0_24 = arith.constant 0 : index
    %c0_25 = arith.constant 0 : index
    %33 = vector.load %arg10[%c0_24, %c0_25] : memref<200x175xbf16, #tpu.memory_space<vmem>>, vector<200x175xbf16>
    %c0_26 = arith.constant 0 : index
    %c0_27 = arith.constant 0 : index
    %34 = vector.load %arg11[%c0_26, %c0_27] : memref<1x175xf32, #tpu.memory_space<vmem>>, vector<1x175xf32>
    %cst_28 = arith.constant dense<0.000000e+00> : vector<2x175xf32>
    %35 = tpu.matmul %32, %33, %cst_28 {dimension_numbers = #tpu.dot_dimension_numbers<[1], [0], [0], [1], [0, 0, 1, 1], [], []>} : vector<2x200xbf16>, vector<200x175xbf16>, vector<2x175xf32> -> vector<2x175xf32>
    %36 = vector.broadcast %34 : vector<1x175xf32> to vector<2x175xf32>
    %37 = arith.addf %35, %36 : vector<2x175xf32>
    %cst_29 = arith.constant 0.000000e+00 : f32
    %38 = vector.broadcast %cst_29 : f32 to vector<2x175xf32>
    %39 = arith.maximumf %37, %38 : vector<2x175xf32>
    %40 = arith.truncf %39 : vector<2x175xf32> to vector<2x175xbf16>
    %c0_30 = arith.constant 0 : index
    %c0_31 = arith.constant 0 : index
    %41 = vector.load %arg12[%c0_30, %c0_31] : memref<175x100xbf16, #tpu.memory_space<vmem>>, vector<175x100xbf16>
    %c0_32 = arith.constant 0 : index
    %c0_33 = arith.constant 0 : index
    %42 = vector.load %arg13[%c0_32, %c0_33] : memref<1x100xf32, #tpu.memory_space<vmem>>, vector<1x100xf32>
    %cst_34 = arith.constant dense<0.000000e+00> : vector<2x100xf32>
    %43 = tpu.matmul %40, %41, %cst_34 {dimension_numbers = #tpu.dot_dimension_numbers<[1], [0], [0], [1], [0, 0, 1, 1], [], []>} : vector<2x175xbf16>, vector<175x100xbf16>, vector<2x100xf32> -> vector<2x100xf32>
    %44 = vector.broadcast %42 : vector<1x100xf32> to vector<2x100xf32>
    %45 = arith.addf %43, %44 : vector<2x100xf32>
    %cst_35 = arith.constant 0.000000e+00 : f32
    %46 = vector.broadcast %cst_35 : f32 to vector<2x100xf32>
    %47 = arith.maximumf %45, %46 : vector<2x100xf32>
    %c0_36 = arith.constant 0 : index
    %c0_37 = arith.constant 0 : index
    %48 = vector.load %arg14[%c0_36, %c0_37] : memref<2x100xf32, #tpu.memory_space<vmem>>, vector<2x100xf32>
    tpu.vector_store %arg14[%c0_36, %c0_37], %47 {strides = array<i32>} : memref<2x100xf32, #tpu.memory_space<vmem>>, vector<2x100xf32>,
    return
  }
  func.func @transform_0(%arg0: i32) -> (i32, i32) {
    %c0_i32 = arith.constant 0 : i32
    %c0_i32_0 = arith.constant 0 : i32
    return %arg0, %c0_i32 : i32, i32
  }
  func.func @transform_1(%arg0: i32) -> (i32, i32) {
    %c0_i32 = arith.constant 0 : i32
    %c0_i32_0 = arith.constant 0 : i32
    %c0_i32_1 = arith.constant 0 : i32
    return %c0_i32, %c0_i32_0 : i32, i32
  }
  func.func @transform_2(%arg0: i32) -> (i32, i32) {
    %c0_i32 = arith.constant 0 : i32
    %c0_i32_0 = arith.constant 0 : i32
    %c0_i32_1 = arith.constant 0 : i32
    return %c0_i32, %c0_i32_0 : i32, i32
  }
  func.func @transform_3(%arg0: i32) -> (i32, i32) {
    %c0_i32 = arith.constant 0 : i32
    %c0_i32_0 = arith.constant 0 : i32
    %c0_i32_1 = arith.constant 0 : i32
    return %c0_i32, %c0_i32_0 : i32, i32
  }
  func.func @transform_4(%arg0: i32) -> (i32, i32) {
    %c0_i32 = arith.constant 0 : i32
    %c0_i32_0 = arith.constant 0 : i32
    %c0_i32_1 = arith.constant 0 : i32
    return %c0_i32, %c0_i32_0 : i32, i32
  }
  func.func @transform_5(%arg0: i32) -> (i32, i32) {
    %c0_i32 = arith.constant 0 : i32
    %c0_i32_0 = arith.constant 0 : i32
    %c0_i32_1 = arith.constant 0 : i32
    return %c0_i32, %c0_i32_0 : i32, i32
  }
  func.func @transform_6(%arg0: i32) -> (i32, i32) {
    %c0_i32 = arith.constant 0 : i32
    %c0_i32_0 = arith.constant 0 : i32
    %c0_i32_1 = arith.constant 0 : i32
    return %c0_i32, %c0_i32_0 : i32, i32
  }
  func.func @transform_7(%arg0: i32) -> (i32, i32) {
    %c0_i32 = arith.constant 0 : i32
    %c0_i32_0 = arith.constant 0 : i32
    %c0_i32_1 = arith.constant 0 : i32
    return %c0_i32, %c0_i32_0 : i32, i32
  }
  func.func @transform_8(%arg0: i32) -> (i32, i32) {
    %c0_i32 = arith.constant 0 : i32
    %c0_i32_0 = arith.constant 0 : i32
    %c0_i32_1 = arith.constant 0 : i32
    return %c0_i32, %c0_i32_0 : i32, i32
  }
  func.func @transform_9(%arg0: i32) -> (i32, i32) {
    %c0_i32 = arith.constant 0 : i32
    %c0_i32_0 = arith.constant 0 : i32
    %c0_i32_1 = arith.constant 0 : i32
    return %c0_i32, %c0_i32_0 : i32, i32
  }
  func.func @transform_10(%arg0: i32) -> (i32, i32) {
    %c0_i32 = arith.constant 0 : i32
    %c0_i32_0 = arith.constant 0 : i32
    %c0_i32_1 = arith.constant 0 : i32
    return %c0_i32, %c0_i32_0 : i32, i32
  }
  func.func @transform_11(%arg0: i32) -> (i32, i32) {
    %c0_i32 = arith.constant 0 : i32
    %c0_i32_0 = arith.constant 0 : i32
    %c0_i32_1 = arith.constant 0 : i32
    return %c0_i32, %c0_i32_0 : i32, i32
  }
  func.func @transform_12(%arg0: i32) -> (i32, i32) {
    %c0_i32 = arith.constant 0 : i32
    %c0_i32_0 = arith.constant 0 : i32
    %c0_i32_1 = arith.constant 0 : i32
    return %c0_i32, %c0_i32_0 : i32, i32
  }
  func.func @transform_13(%arg0: i32) -> (i32, i32) {
    %c0_i32 = arith.constant 0 : i32
    %c0_i32_0 = arith.constant 0 : i32
    return %arg0, %c0_i32 : i32, i32
  }
}

</mosaic_0001>

<llo_original>
// kernel: dlcm_hex_8_7_forward.1
$region0: #{dlcm_hex_8_7_forward.1}
  #allocation0 [shape = 'u32[]', space=smem, size = 0x4, offset = 0x4, fixed_abs, tag = 'smem constant byte address 0x4 - core index']
  #allocation1 [shape = 'u32[144,128]{1,0:T(1,128)}', space=vmem, size = 0x12000, scoped, tag = 'internal scratch']
  %s0 = inlined_call_operand.vmem [shape: bf16[2,120], index: 0, kind: input, shape index: {}]
  %s1 = inlined_call_operand.vmem [shape: bf16[120,250], index: 1, kind: input, shape index: {}]
  %s2 = inlined_call_operand.vmem [shape: f32[1,250], index: 2, kind: input, shape index: {}]
  %s3 = inlined_call_operand.vmem [shape: bf16[250,250], index: 3, kind: input, shape index: {}]
  %s4 = inlined_call_operand.vmem [shape: f32[1,250], index: 4, kind: input, shape index: {}]
  %s5 = inlined_call_operand.vmem [shape: bf16[250,225], index: 5, kind: input, shape index: {}]
  %s6 = inlined_call_operand.vmem [shape: f32[1,225], index: 6, kind: input, shape index: {}]
  %s7 = inlined_call_operand.vmem [shape: bf16[225,200], index: 7, kind: input, shape index: {}]
  %s8 = inlined_call_operand.vmem [shape: f32[1,200], index: 8, kind: input, shape index: {}]
  %s9 = inlined_call_operand.vmem [shape: bf16[200,175], index: 9, kind: input, shape index: {}]
  %s10 = inlined_call_operand.vmem [shape: f32[1,175], index: 10, kind: input, shape index: {}]
  %s11 = inlined_call_operand.vmem [shape: bf16[175,100], index: 11, kind: input, shape index: {}]
  %s12 = inlined_call_operand.vmem [shape: f32[1,100], index: 12, kind: input, shape index: {}]
  %s13 = inlined_call_operand.vmem [shape: f32[2,100], index: 13, kind: output, shape index: {}]
  %s14 = sld [smem:[#allocation0]]
  $region62: #{dlcm_hex_8_7_forward.1} parent=0
    _
  %s16 = ssub.s32 1, %s14
  %s17 = scalar_select 0, %s16, %s14
  // Predicated region
  $region2: #{dlcm_hex_8_7_forward.1} parent=0 // pred_check
    _
  $region3: #{dlcm_hex_8_7_forward.1} parent=0 // pred_check_branch
    %19 = sbr.rel (0) target = $region5
  $region4: #{dlcm_hex_8_7_forward.1} parent=0 // pred_region
    _
  $region5: #{dlcm_hex_8_7_forward.1} parent=0 // pred_fallthru
    _
  // Predicated region
  $region6: #{dlcm_hex_8_7_forward.1} parent=0 // pred_check
    _
  $region7: #{dlcm_hex_8_7_forward.1} parent=0 // pred_check_branch
    %21 = sbr.rel (0) target = $region9
  $region8: #{dlcm_hex_8_7_forward.1} parent=0 // pred_region
    _
  $region9: #{dlcm_hex_8_7_forward.1} parent=0 // pred_fallthru
    _
  // Predicated region
  $region10: #{dlcm_hex_8_7_forward.1} parent=0 // pred_check
    _
  $region11: #{dlcm_hex_8_7_forward.1} parent=0 // pred_check_branch
    %23 = sbr.rel (0) target = $region13
  $region12: #{dlcm_hex_8_7_forward.1} parent=0 // pred_region
    _
  $region13: #{dlcm_hex_8_7_forward.1} parent=0 // pred_fallthru
    _
  // Predicated region
  $region14: #{dlcm_hex_8_7_forward.1} parent=0 // pred_check
    _
  $region15: #{dlcm_hex_8_7_forward.1} parent=0 // pred_check_branch
    %25 = sbr.rel (0) target = $region17
  $region16: #{dlcm_hex_8_7_forward.1} parent=0 // pred_region
    _
  $region17: #{dlcm_hex_8_7_forward.1} parent=0 // pred_fallthru
    _
  // Predicated region
  $region18: #{dlcm_hex_8_7_forward.1} parent=0 // pred_check
    _
  $region19: #{dlcm_hex_8_7_forward.1} parent=0 // pred_check_branch
    %27 = sbr.rel (0) target = $region21
  $region20: #{dlcm_hex_8_7_forward.1} parent=0 // pred_region
    _
  $region21: #{dlcm_hex_8_7_forward.1} parent=0 // pred_fallthru
    _
  // Predicated region
  $region22: #{dlcm_hex_8_7_forward.1} parent=0 // pred_check
    _
  $region23: #{dlcm_hex_8_7_forward.1} parent=0 // pred_check_branch
    %29 = sbr.rel (0) target = $region25
  $region24: #{dlcm_hex_8_7_forward.1} parent=0 // pred_region
    _
  $region25: #{dlcm_hex_8_7_forward.1} parent=0 // pred_fallthru
    _
  // Predicated region
  $region26: #{dlcm_hex_8_7_forward.1} parent=0 // pred_check
    _
  $region27: #{dlcm_hex_8_7_forward.1} parent=0 // pred_check_branch
    %31 = sbr.rel (0) target = $region29
  $region28: #{dlcm_hex_8_7_forward.1} parent=0 // pred_region
    _
  $region29: #{dlcm_hex_8_7_forward.1} parent=0 // pred_fallthru
    _
  // Predicated region
  $region30: #{dlcm_hex_8_7_forward.1} parent=0 // pred_check
    _
  $region31: #{dlcm_hex_8_7_forward.1} parent=0 // pred_check_branch
    %33 = sbr.rel (0) target = $region33
  $region32: #{dlcm_hex_8_7_forward.1} parent=0 // pred_region
    _
  $region33: #{dlcm_hex_8_7_forward.1} parent=0 // pred_fallthru
    _
  // Predicated region
  $region34: #{dlcm_hex_8_7_forward.1} parent=0 // pred_check
    _
  $region35: #{dlcm_hex_8_7_forward.1} parent=0 // pred_check_branch
    %35 = sbr.rel (0) target = $region37
  $region36: #{dlcm_hex_8_7_forward.1} parent=0 // pred_region
    _
  $region37: #{dlcm_hex_8_7_forward.1} parent=0 // pred_fallthru
    _
  // Predicated region
  $region38: #{dlcm_hex_8_7_forward.1} parent=0 // pred_check
    _
  $region39: #{dlcm_hex_8_7_forward.1} parent=0 // pred_check_branch
    %37 = sbr.rel (0) target = $region41
  $region40: #{dlcm_hex_8_7_forward.1} parent=0 // pred_region
    _
  $region41: #{dlcm_hex_8_7_forward.1} parent=0 // pred_fallthru
    _
  // Predicated region
  $region42: #{dlcm_hex_8_7_forward.1} parent=0 // pred_check
    _
  $region43: #{dlcm_hex_8_7_forward.1} parent=0 // pred_check_branch
    %39 = sbr.rel (0) target = $region45
  $region44: #{dlcm_hex_8_7_forward.1} parent=0 // pred_region
    _
  $region45: #{dlcm_hex_8_7_forward.1} parent=0 // pred_fallthru
    _
  // Predicated region
  $region46: #{dlcm_hex_8_7_forward.1} parent=0 // pred_check
    _
  $region47: #{dlcm_hex_8_7_forward.1} parent=0 // pred_check_branch
    %41 = sbr.rel (0) target = $region49
  $region48: #{dlcm_hex_8_7_forward.1} parent=0 // pred_region
    _
  $region49: #{dlcm_hex_8_7_forward.1} parent=0 // pred_fallthru
    _
  // Predicated region
  $region50: #{dlcm_hex_8_7_forward.1} parent=0 // pred_check
    _
  $region51: #{dlcm_hex_8_7_forward.1} parent=0 // pred_check_branch
    %43 = sbr.rel (0) target = $region53
  $region52: #{dlcm_hex_8_7_forward.1} parent=0 // pred_region
    _
  $region53: #{dlcm_hex_8_7_forward.1} parent=0 // pred_fallthru
    _
  %v45 = vld [vmem:[%s0] sm:$0x1]
  %v46 = vld [vmem:[%s1] sm:$0xff]
  %v47 = vld [vmem:[%s1 + $0x8] sm:$0xff]
  %v48 = vld [vmem:[%s1 + $0x10] sm:$0xff]
  %v49 = vld [vmem:[%s1 + $0x18] sm:$0xff]
  %v50 = vld [vmem:[%s1 + $0x20] sm:$0xff]
  %v51 = vld [vmem:[%s1 + $0x28] sm:$0xff]
  %v52 = vld [vmem:[%s1 + $0x30] sm:$0xff]
  %v53 = vld [vmem:[%s1 + $0x38] sm:$0xff]
  %v54 = vld [vmem:[%s1 + $0x40] sm:$0xff]
  %v55 = vld [vmem:[%s1 + $0x48] sm:$0xff]
  %v56 = vld [vmem:[%s1 + $0x50] sm:$0xff]
  %v57 = vld [vmem:[%s1 + $0x58] sm:$0xff]
  %v58 = vld [vmem:[%s1 + $0x60] sm:$0xff]
  %v59 = vld [vmem:[%s1 + $0x68] sm:$0xff]
  %v60 = vld [vmem:[%s1 + $0x70] sm:$0xff]
  %v61 = vld [vmem:[%s2] sm:$0x3]
  %v63 = vlaneseq
  %v64 = vshrl.u32 %v63, 7
  %v65 = vsub.s32 0, %v64
  %v66 = vrot.slane %v61, %v65
  %v67 = vlaneseq
  %v68 = vshrl.u32 %v67, 7
  %v69 = vsub.s32 1, %v68
  %v70 = vrot.slane %v61, %v69
  %v88 = vunpack.c.l.b16 %v46
  %v89 = vunpack.c.h.b16 %v46
  %v90 = vunpack.c.l.b16 %v47
  %v91 = vunpack.c.h.b16 %v47
  %v92 = vunpack.c.l.b16 %v48
  %v93 = vunpack.c.h.b16 %v48
  %v94 = vunpack.c.l.b16 %v49
  %v95 = vunpack.c.h.b16 %v49
  %v96 = vunpack.c.l.b16 %v50
  %v97 = vunpack.c.h.b16 %v50
  %v98 = vunpack.c.l.b16 %v51
  %v99 = vunpack.c.h.b16 %v51
  %v100 = vunpack.c.l.b16 %v52
  %v101 = vunpack.c.h.b16 %v52
  %v102 = vunpack.c.l.b16 %v53
  %v103 = vunpack.c.h.b16 %v53
  %v104 = vunpack.c.l.b16 %v54
  %v105 = vunpack.c.h.b16 %v54
  %v106 = vunpack.c.l.b16 %v55
  %v107 = vunpack.c.h.b16 %v55
  %v108 = vunpack.c.l.b16 %v56
  %v109 = vunpack.c.h.b16 %v56
  %v110 = vunpack.c.l.b16 %v57
  %v111 = vunpack.c.h.b16 %v57
  %v112 = vunpack.c.l.b16 %v58
  %v113 = vunpack.c.h.b16 %v58
  %v114 = vunpack.c.l.b16 %v59
  %v115 = vunpack.c.h.b16 %v59
  %v116 = vunpack.c.l.b16 %v60
  %v117 = vunpack.c.h.b16 %v60
  %v118 = vpack.c.b16 %v90, %v88
  %v119 = vpack.c.b16 %v91, %v89
  %v120 = vpack.c.b16 %v94, %v92
  %v121 = vpack.c.b16 %v95, %v93
  %v122 = vpack.c.b16 %v98, %v96
  %v123 = vpack.c.b16 %v99, %v97
  %v124 = vpack.c.b16 %v102, %v100
  %v125 = vpack.c.b16 %v103, %v101
  %v126 = vpack.c.b16 %v106, %v104
  %v127 = vpack.c.b16 %v107, %v105
  %v128 = vpack.c.b16 %v110, %v108
  %v129 = vpack.c.b16 %v111, %v109
  %v130 = vpack.c.b16 %v114, %v112
  %v131 = vpack.c.b16 %v115, %v113
  %v132 = vpack.c.b16 %v116, %v116
  %v133 = vpack.c.b16 %v117, %v117
  %vm148 = vcmask 982016
  %v150 = vsel %vm148, %v45, 0
  %vm152 = vcmask 1043456
  %v154 = vsel %vm152, %v132, 0
  %v157 = vsel %vm152, %v133, 0
  %159 = vmatprep.subr.bf16.mxu0 %v119
  %160 = vmatpush1.bf16.msra.mxu0 %v118
  %161 = vmatprep.subr.bf16.mxu0 %v121
  %162 = vmatpush1.bf16.msra.mxu0 %v120
  %163 = vmatprep.subr.bf16.mxu0 %v123
  %164 = vmatpush1.bf16.msra.mxu0 %v122
  %165 = vmatprep.subr.bf16.mxu0 %v125
  %166 = vmatpush1.bf16.msra.mxu0 %v124
  %167 = vmatprep.subr.bf16.mxu0 %v127
  %168 = vmatpush1.bf16.msra.mxu0 %v126
  %169 = vmatprep.subr.bf16.mxu0 %v129
  %170 = vmatpush1.bf16.msra.mxu0 %v128
  %171 = vmatprep.subr.bf16.mxu0 %v131
  %172 = vmatpush1.bf16.msra.mxu0 %v130
  %173 = vmatprep.subr.bf16.mxu0 %v157
  %174 = vmatpush1.bf16.msra.mxu0 %v154
  %175 = vmatprep.subr.bf16.mxu0 0
  %176 = vmatpush1.bf16.msra.mxu0 0
  %177 = vmatprep.subr.bf16.mxu0 0
  %178 = vmatpush1.bf16.msra.mxu0 0
  %179 = vmatprep.subr.bf16.mxu0 0
  %180 = vmatpush1.bf16.msra.mxu0 0
  %181 = vmatprep.subr.bf16.mxu0 0
  %182 = vmatpush1.bf16.msra.mxu0 0
  %183 = vmatprep.subr.bf16.mxu0 0
  %184 = vmatpush1.bf16.msra.mxu0 0
  %185 = vmatprep.subr.bf16.mxu0 0
  %186 = vmatpush1.bf16.msra.mxu0 0
  %187 = vmatprep.subr.bf16.mxu0 0
  %188 = vmatpush1.bf16.msra.mxu0 0
  %189 = vmatprep.subr.bf16.mxu0 0
  %190 = vmatpush1.bf16.msra.mxu0 0
  %191 = vmatprep.mubr.bf16.mxu0 0
  %192 = vmatmul.mubr.bf16.gmra.mrb[0].mxu0 %v150
  %v193 = vpop.f32.mrb[0].mxu0
  %v194 = vadd.f32 %v66, %v193
  %v195 = vpop.f32.mrb[0].mxu0
  %v196 = vadd.f32 %v70, %v195
  %v197 = vpop.f32.mrb[0].mxu0
  %v198 = vpop.f32.mrb[0].mxu0
  %199 = vdwg.mxu0
  %v200 = vmax.f32 %v194, 0.0
  %v201 = vmax.f32 %v196, 0.0
  %v202 = vpack.c.bf16 %v200, %v200
  %v203 = vpack.c.bf16 %v201, %v201
  %v204 = vld [vmem:[%s3] sm:$0xff]
  %v205 = vld [vmem:[%s3 + $0x8] sm:$0xff]
  %v206 = vld [vmem:[%s3 + $0x10] sm:$0xff]
  %v207 = vld [vmem:[%s3 + $0x18] sm:$0xff]
  %v208 = vld [vmem:[%s3 + $0x20] sm:$0xff]
  %v209 = vld [vmem:[%s3 + $0x28] sm:$0xff]
  %v210 = vld [vmem:[%s3 + $0x30] sm:$0xff]
  %v211 = vld [vmem:[%s3 + $0x38] sm:$0xff]
  %v212 = vld [vmem:[%s3 + $0x40] sm:$0xff]
  %v213 = vld [vmem:[%s3 + $0x48] sm:$0xff]
  %v214 = vld [vmem:[%s3 + $0x50] sm:$0xff]
  %v215 = vld [vmem:[%s3 + $0x58] sm:$0xff]
  %v216 = vld [vmem:[%s3 + $0x60] sm:$0xff]
  %v217 = vld [vmem:[%s3 + $0x68] sm:$0xff]
  %v218 = vld [vmem:[%s3 + $0x70] sm:$0xff]
  %v219 = vld [vmem:[%s3 + $0x78] sm:$0xff]
  %v220 = vld [vmem:[%s3 + $0x80] sm:$0xff]
  %v221 = vld [vmem:[%s3 + $0x88] sm:$0xff]
  %v222 = vld [vmem:[%s3 + $0x90] sm:$0xff]
  %v223 = vld [vmem:[%s3 + $0x98] sm:$0xff]
  %v224 = vld [vmem:[%s3 + $0xa0] sm:$0xff]
  %v225 = vld [vmem:[%s3 + $0xa8] sm:$0xff]
  %v226 = vld [vmem:[%s3 + $0xb0] sm:$0xff]
  %v227 = vld [vmem:[%s3 + $0xb8] sm:$0xff]
  %v228 = vld [vmem:[%s3 + $0xc0] sm:$0xff]
  %v229 = vld [vmem:[%s3 + $0xc8] sm:$0xff]
  %v230 = vld [vmem:[%s3 + $0xd0] sm:$0xff]
  %v231 = vld [vmem:[%s3 + $0xd8] sm:$0xff]
  %v232 = vld [vmem:[%s3 + $0xe0] sm:$0xff]
  %v233 = vld [vmem:[%s3 + $0xe8] sm:$0xff]
  %v234 = vld [vmem:[%s3 + $0xf0] sm:$0xff]
  %v235 = vld [vmem:[%s3 + $0xf8] sm:$0x11]
  %v236 = vld [vmem:[%s4] sm:$0x3]
  %v238 = vlaneseq
  %v239 = vshrl.u32 %v238, 7
  %v240 = vsub.s32 0, %v239
  %v241 = vrot.slane %v236, %v240
  %v242 = vlaneseq
  %v243 = vshrl.u32 %v242, 7
  %v244 = vsub.s32 1, %v243
  %v245 = vrot.slane %v236, %v244
  %v280 = vunpack.c.l.b16 %v204
  %v281 = vunpack.c.h.b16 %v204
  %v282 = vunpack.c.l.b16 %v205
  %v283 = vunpack.c.h.b16 %v205
  %v284 = vunpack.c.l.b16 %v206
  %v285 = vunpack.c.h.b16 %v206
  %v286 = vunpack.c.l.b16 %v207
  %v287 = vunpack.c.h.b16 %v207
  %v288 = vunpack.c.l.b16 %v208
  %v289 = vunpack.c.h.b16 %v208
  %v290 = vunpack.c.l.b16 %v209
  %v291 = vunpack.c.h.b16 %v209
  %v292 = vunpack.c.l.b16 %v210
  %v293 = vunpack.c.h.b16 %v210
  %v294 = vunpack.c.l.b16 %v211
  %v295 = vunpack.c.h.b16 %v211
  %v296 = vunpack.c.l.b16 %v212
  %v297 = vunpack.c.h.b16 %v212
  %v298 = vunpack.c.l.b16 %v213
  %v299 = vunpack.c.h.b16 %v213
  %v300 = vunpack.c.l.b16 %v214
  %v301 = vunpack.c.h.b16 %v214
  %v302 = vunpack.c.l.b16 %v215
  %v303 = vunpack.c.h.b16 %v215
  %v304 = vunpack.c.l.b16 %v216
  %v305 = vunpack.c.h.b16 %v216
  %v306 = vunpack.c.l.b16 %v217
  %v307 = vunpack.c.h.b16 %v217
  %v308 = vunpack.c.l.b16 %v218
  %v309 = vunpack.c.h.b16 %v218
  %v310 = vunpack.c.l.b16 %v219
  %v311 = vunpack.c.h.b16 %v219
  %v312 = vunpack.c.l.b16 %v220
  %v313 = vunpack.c.h.b16 %v220
  %v314 = vunpack.c.l.b16 %v221
  %v315 = vunpack.c.h.b16 %v221
  %v316 = vunpack.c.l.b16 %v222
  %v317 = vunpack.c.h.b16 %v222
  %v318 = vunpack.c.l.b16 %v223
  %v319 = vunpack.c.h.b16 %v223
  %v320 = vunpack.c.l.b16 %v224
  %v321 = vunpack.c.h.b16 %v224
  %v322 = vunpack.c.l.b16 %v225
  %v323 = vunpack.c.h.b16 %v225
  %v324 = vunpack.c.l.b16 %v226
  %v325 = vunpack.c.h.b16 %v226
  %v326 = vunpack.c.l.b16 %v227
  %v327 = vunpack.c.h.b16 %v227
  %v328 = vunpack.c.l.b16 %v228
  %v329 = vunpack.c.h.b16 %v228
  %v330 = vunpack.c.l.b16 %v229
  %v331 = vunpack.c.h.b16 %v229
  %v332 = vunpack.c.l.b16 %v230
  %v333 = vunpack.c.h.b16 %v230
  %v334 = vunpack.c.l.b16 %v231
  %v335 = vunpack.c.h.b16 %v231
  %v336 = vunpack.c.l.b16 %v232
  %v337 = vunpack.c.h.b16 %v232
  %v338 = vunpack.c.l.b16 %v233
  %v339 = vunpack.c.h.b16 %v233
  %v340 = vunpack.c.l.b16 %v234
  %v341 = vunpack.c.h.b16 %v234
  %v342 = vunpack.c.l.b16 %v235
  %v343 = vunpack.c.h.b16 %v235
  %v344 = vpack.c.b16 %v282, %v280
  %v345 = vpack.c.b16 %v283, %v281
  %v346 = vpack.c.b16 %v286, %v284
  %v347 = vpack.c.b16 %v287, %v285
  %v348 = vpack.c.b16 %v290, %v288
  %v349 = vpack.c.b16 %v291, %v289
  %v350 = vpack.c.b16 %v294, %v292
  %v351 = vpack.c.b16 %v295, %v293
  %v352 = vpack.c.b16 %v298, %v296
  %v353 = vpack.c.b16 %v299, %v297
  %v354 = vpack.c.b16 %v302, %v300
  %v355 = vpack.c.b16 %v303, %v301
  %v356 = vpack.c.b16 %v306, %v304
  %v357 = vpack.c.b16 %v307, %v305
  %v358 = vpack.c.b16 %v310, %v308
  %v359 = vpack.c.b16 %v311, %v309
  %v360 = vpack.c.b16 %v314, %v312
  %v361 = vpack.c.b16 %v315, %v313
  %v362 = vpack.c.b16 %v318, %v316
  %v363 = vpack.c.b16 %v319, %v317
  %v364 = vpack.c.b16 %v322, %v320
  %v365 = vpack.c.b16 %v323, %v321
  %v366 = vpack.c.b16 %v326, %v324
  %v367 = vpack.c.b16 %v327, %v325
  %v368 = vpack.c.b16 %v330, %v328
  %v369 = vpack.c.b16 %v331, %v329
  %v370 = vpack.c.b16 %v334, %v332
  %v371 = vpack.c.b16 %v335, %v333
  %v372 = vpack.c.b16 %v338, %v336
  %v373 = vpack.c.b16 %v339, %v337
  %v374 = vpack.c.b16 %v342, %v340
  %v375 = vpack.c.b16 %v343, %v341
  %vm406 = vcmask 998400
  %v408 = vsel %vm406, %v203, 0
  %vm410 = vcmask 1044480
  %v412 = vsel %vm410, %v374, 0
  %v415 = vsel %vm410, %v375, 0
  %417 = vmatprep.subr.bf16.mxu0 %v345
  %418 = vmatpush1.bf16.msra.mxu0 %v344
  %419 = vmatprep.subr.bf16.mxu0 %v347
  %420 = vmatpush1.bf16.msra.mxu0 %v346
  %421 = vmatprep.subr.bf16.mxu0 %v349
  %422 = vmatpush1.bf16.msra.mxu0 %v348
  %423 = vmatprep.subr.bf16.mxu0 %v351
  %424 = vmatpush1.bf16.msra.mxu0 %v350
  %425 = vmatprep.subr.bf16.mxu0 %v353
  %426 = vmatpush1.bf16.msra.mxu0 %v352
  %427 = vmatprep.subr.bf16.mxu0 %v355
  %428 = vmatpush1.bf16.msra.mxu0 %v354
  %429 = vmatprep.subr.bf16.mxu0 %v357
  %430 = vmatpush1.bf16.msra.mxu0 %v356
  %431 = vmatprep.subr.bf16.mxu0 %v359
  %432 = vmatpush1.bf16.msra.mxu0 %v358
  %433 = vmatprep.subr.bf16.mxu0 %v361
  %434 = vmatpush1.bf16.msra.mxu0 %v360
  %435 = vmatprep.subr.bf16.mxu0 %v363
  %436 = vmatpush1.bf16.msra.mxu0 %v362
  %437 = vmatprep.subr.bf16.mxu0 %v365
  %438 = vmatpush1.bf16.msra.mxu0 %v364
  %439 = vmatprep.subr.bf16.mxu0 %v367
  %440 = vmatpush1.bf16.msra.mxu0 %v366
  %441 = vmatprep.subr.bf16.mxu0 %v369
  %442 = vmatpush1.bf16.msra.mxu0 %v368
  %443 = vmatprep.subr.bf16.mxu0 %v371
  %444 = vmatpush1.bf16.msra.mxu0 %v370
  %445 = vmatprep.subr.bf16.mxu0 %v373
  %446 = vmatpush1.bf16.msra.mxu0 %v372
  %447 = vmatprep.subr.bf16.mxu0 %v415
  %448 = vmatpush1.bf16.msra.mxu0 %v412
  %449 = vmatprep.mubr.bf16.mxu0 %v408
  %450 = vmatmul.mubr.bf16.gmra.mrb[0].mxu0 %v202
  %v451 = vpop.f32.mrb[0].mxu0
  %v452 = vadd.f32 %v241, %v451
  %v453 = vpop.f32.mrb[0].mxu0
  %v454 = vadd.f32 %v245, %v453
  %v455 = vpop.f32.mrb[0].mxu0
  %v456 = vpop.f32.mrb[0].mxu0
  %457 = vdwg.mxu0
  %v458 = vmax.f32 %v452, 0.0
  %v459 = vmax.f32 %v454, 0.0
  %v460 = vpack.c.bf16 %v458, %v458
  %v461 = vpack.c.bf16 %v459, %v459
  %v462 = vld [vmem:[%s5] sm:$0xff]
  %v463 = vld [vmem:[%s5 + $0x8] sm:$0xff]
  %v464 = vld [vmem:[%s5 + $0x10] sm:$0xff]
  %v465 = vld [vmem:[%s5 + $0x18] sm:$0xff]
  %v466 = vld [vmem:[%s5 + $0x20] sm:$0xff]
  %v467 = vld [vmem:[%s5 + $0x28] sm:$0xff]
  %v468 = vld [vmem:[%s5 + $0x30] sm:$0xff]
  %v469 = vld [vmem:[%s5 + $0x38] sm:$0xff]
  %v470 = vld [vmem:[%s5 + $0x40] sm:$0xff]
  %v471 = vld [vmem:[%s5 + $0x48] sm:$0xff]
  %v472 = vld [vmem:[%s5 + $0x50] sm:$0xff]
  %v473 = vld [vmem:[%s5 + $0x58] sm:$0xff]
  %v474 = vld [vmem:[%s5 + $0x60] sm:$0xff]
  %v475 = vld [vmem:[%s5 + $0x68] sm:$0xff]
  %v476 = vld [vmem:[%s5 + $0x70] sm:$0xff]
  %v477 = vld [vmem:[%s5 + $0x78] sm:$0xff]
  %v478 = vld [vmem:[%s5 + $0x80] sm:$0xff]
  %v479 = vld [vmem:[%s5 + $0x88] sm:$0xff]
  %v480 = vld [vmem:[%s5 + $0x90] sm:$0xff]
  %v481 = vld [vmem:[%s5 + $0x98] sm:$0xff]
  %v482 = vld [vmem:[%s5 + $0xa0] sm:$0xff]
  %v483 = vld [vmem:[%s5 + $0xa8] sm:$0xff]
  %v484 = vld [vmem:[%s5 + $0xb0] sm:$0xff]
  %v485 = vld [vmem:[%s5 + $0xb8] sm:$0xff]
  %v486 = vld [vmem:[%s5 + $0xc0] sm:$0xff]
  %v487 = vld [vmem:[%s5 + $0xc8] sm:$0xff]
  %v488 = vld [vmem:[%s5 + $0xd0] sm:$0xff]
  %v489 = vld [vmem:[%s5 + $0xd8] sm:$0xff]
  %v490 = vld [vmem:[%s5 + $0xe0] sm:$0xff]
  %v491 = vld [vmem:[%s5 + $0xe8] sm:$0xff]
  %v492 = vld [vmem:[%s5 + $0xf0] sm:$0xff]
  %v493 = vld [vmem:[%s5 + $0xf8] sm:$0x11]
  %v494 = vld [vmem:[%s6] sm:$0x3]
  %v496 = vlaneseq
  %v497 = vshrl.u32 %v496, 7
  %v498 = vsub.s32 0, %v497
  %v499 = vrot.slane %v494, %v498
  %v500 = vlaneseq
  %v501 = vshrl.u32 %v500, 7
  %v502 = vsub.s32 1, %v501
  %v503 = vrot.slane %v494, %v502
  %v538 = vunpack.c.l.b16 %v462
  %v539 = vunpack.c.h.b16 %v462
  %v540 = vunpack.c.l.b16 %v463
  %v541 = vunpack.c.h.b16 %v463
  %v542 = vunpack.c.l.b16 %v464
  %v543 = vunpack.c.h.b16 %v464
  %v544 = vunpack.c.l.b16 %v465
  %v545 = vunpack.c.h.b16 %v465
  %v546 = vunpack.c.l.b16 %v466
  %v547 = vunpack.c.h.b16 %v466
  %v548 = vunpack.c.l.b16 %v467
  %v549 = vunpack.c.h.b16 %v467
  %v550 = vunpack.c.l.b16 %v468
  %v551 = vunpack.c.h.b16 %v468
  %v552 = vunpack.c.l.b16 %v469
  %v553 = vunpack.c.h.b16 %v469
  %v554 = vunpack.c.l.b16 %v470
  %v555 = vunpack.c.h.b16 %v470
  %v556 = vunpack.c.l.b16 %v471
  %v557 = vunpack.c.h.b16 %v471
  %v558 = vunpack.c.l.b16 %v472
  %v559 = vunpack.c.h.b16 %v472
  %v560 = vunpack.c.l.b16 %v473
  %v561 = vunpack.c.h.b16 %v473
  %v562 = vunpack.c.l.b16 %v474
  %v563 = vunpack.c.h.b16 %v474
  %v564 = vunpack.c.l.b16 %v475
  %v565 = vunpack.c.h.b16 %v475
  %v566 = vunpack.c.l.b16 %v476
  %v567 = vunpack.c.h.b16 %v476
  %v568 = vunpack.c.l.b16 %v477
  %v569 = vunpack.c.h.b16 %v477
  %v570 = vunpack.c.l.b16 %v478
  %v571 = vunpack.c.h.b16 %v478
  %v572 = vunpack.c.l.b16 %v479
  %v573 = vunpack.c.h.b16 %v479
  %v574 = vunpack.c.l.b16 %v480
  %v575 = vunpack.c.h.b16 %v480
  %v576 = vunpack.c.l.b16 %v481
  %v577 = vunpack.c.h.b16 %v481
  %v578 = vunpack.c.l.b16 %v482
  %v579 = vunpack.c.h.b16 %v482
  %v580 = vunpack.c.l.b16 %v483
  %v581 = vunpack.c.h.b16 %v483
  %v582 = vunpack.c.l.b16 %v484
  %v583 = vunpack.c.h.b16 %v484
  %v584 = vunpack.c.l.b16 %v485
  %v585 = vunpack.c.h.b16 %v485
  %v586 = vunpack.c.l.b16 %v486
  %v587 = vunpack.c.h.b16 %v486
  %v588 = vunpack.c.l.b16 %v487
  %v589 = vunpack.c.h.b16 %v487
  %v590 = vunpack.c.l.b16 %v488
  %v591 = vunpack.c.h.b16 %v488
  %v592 = vunpack.c.l.b16 %v489
  %v593 = vunpack.c.h.b16 %v489
  %v594 = vunpack.c.l.b16 %v490
  %v595 = vunpack.c.h.b16 %v490
  %v596 = vunpack.c.l.b16 %v491
  %v597 = vunpack.c.h.b16 %v491
  %v598 = vunpack.c.l.b16 %v492
  %v599 = vunpack.c.h.b16 %v492
  %v600 = vunpack.c.l.b16 %v493
  %v601 = vunpack.c.h.b16 %v493
  %v602 = vpack.c.b16 %v540, %v538
  %v603 = vpack.c.b16 %v541, %v539
  %v604 = vpack.c.b16 %v544, %v542
  %v605 = vpack.c.b16 %v545, %v543
  %v606 = vpack.c.b16 %v548, %v546
  %v607 = vpack.c.b16 %v549, %v547
  %v608 = vpack.c.b16 %v552, %v550
  %v609 = vpack.c.b16 %v553, %v551
  %v610 = vpack.c.b16 %v556, %v554
  %v611 = vpack.c.b16 %v557, %v555
  %v612 = vpack.c.b16 %v560, %v558
  %v613 = vpack.c.b16 %v561, %v559
  %v614 = vpack.c.b16 %v564, %v562
  %v615 = vpack.c.b16 %v565, %v563
  %v616 = vpack.c.b16 %v568, %v566
  %v617 = vpack.c.b16 %v569, %v567
  %v618 = vpack.c.b16 %v572, %v570
  %v619 = vpack.c.b16 %v573, %v571
  %v620 = vpack.c.b16 %v576, %v574
  %v621 = vpack.c.b16 %v577, %v575
  %v622 = vpack.c.b16 %v580, %v578
  %v623 = vpack.c.b16 %v581, %v579
  %v624 = vpack.c.b16 %v584, %v582
  %v625 = vpack.c.b16 %v585, %v583
  %v626 = vpack.c.b16 %v588, %v586
  %v627 = vpack.c.b16 %v589, %v587
  %v628 = vpack.c.b16 %v592, %v590
  %v629 = vpack.c.b16 %v593, %v591
  %v630 = vpack.c.b16 %v596, %v594
  %v631 = vpack.c.b16 %v597, %v595
  %v632 = vpack.c.b16 %v600, %v598
  %v633 = vpack.c.b16 %v601, %v599
  %v665 = vsel %vm406, %v461, 0
  %v668 = vsel %vm410, %v632, 0
  %v671 = vsel %vm410, %v633, 0
  %673 = vmatprep.subr.bf16.mxu0 %v603
  %674 = vmatpush1.bf16.msra.mxu0 %v602
  %675 = vmatprep.subr.bf16.mxu0 %v605
  %676 = vmatpush1.bf16.msra.mxu0 %v604
  %677 = vmatprep.subr.bf16.mxu0 %v607
  %678 = vmatpush1.bf16.msra.mxu0 %v606
  %679 = vmatprep.subr.bf16.mxu0 %v609
  %680 = vmatpush1.bf16.msra.mxu0 %v608
  %681 = vmatprep.subr.bf16.mxu0 %v611
  %682 = vmatpush1.bf16.msra.mxu0 %v610
  %683 = vmatprep.subr.bf16.mxu0 %v613
  %684 = vmatpush1.bf16.msra.mxu0 %v612
  %685 = vmatprep.subr.bf16.mxu0 %v615
  %686 = vmatpush1.bf16.msra.mxu0 %v614
  %687 = vmatprep.subr.bf16.mxu0 %v617
  %688 = vmatpush1.bf16.msra.mxu0 %v616
  %689 = vmatprep.subr.bf16.mxu0 %v619
  %690 = vmatpush1.bf16.msra.mxu0 %v618
  %691 = vmatprep.subr.bf16.mxu0 %v621
  %692 = vmatpush1.bf16.msra.mxu0 %v620
  %693 = vmatprep.subr.bf16.mxu0 %v623
  %694 = vmatpush1.bf16.msra.mxu0 %v622
  %695 = vmatprep.subr.bf16.mxu0 %v625
  %696 = vmatpush1.bf16.msra.mxu0 %v624
  %697 = vmatprep.subr.bf16.mxu0 %v627
  %698 = vmatpush1.bf16.msra.mxu0 %v626
  %699 = vmatprep.subr.bf16.mxu0 %v629
  %700 = vmatpush1.bf16.msra.mxu0 %v628
  %701 = vmatprep.subr.bf16.mxu0 %v631
  %702 = vmatpush1.bf16.msra.mxu0 %v630
  %703 = vmatprep.subr.bf16.mxu0 %v671
  %704 = vmatpush1.bf16.msra.mxu0 %v668
  %705 = vmatprep.mubr.bf16.mxu0 %v665
  %706 = vmatmul.mubr.bf16.gmra.mrb[0].mxu0 %v460
  %v707 = vpop.f32.mrb[0].mxu0
  %v708 = vadd.f32 %v499, %v707
  %v709 = vpop.f32.mrb[0].mxu0
  %v710 = vadd.f32 %v503, %v709
  %v711 = vpop.f32.mrb[0].mxu0
  %v712 = vpop.f32.mrb[0].mxu0
  %713 = vdwg.mxu0
  %v714 = vmax.f32 %v708, 0.0
  %v715 = vmax.f32 %v710, 0.0
  %v716 = vpack.c.bf16 %v714, %v714
  %v717 = vpack.c.bf16 %v715, %v715
  %v718 = vld [vmem:[%s7] sm:$0xff]
  %v719 = vld [vmem:[%s7 + $0x8] sm:$0xff]
  %v720 = vld [vmem:[%s7 + $0x10] sm:$0xff]
  %v721 = vld [vmem:[%s7 + $0x18] sm:$0xff]
  %v722 = vld [vmem:[%s7 + $0x20] sm:$0xff]
  %v723 = vld [vmem:[%s7 + $0x28] sm:$0xff]
  %v724 = vld [vmem:[%s7 + $0x30] sm:$0xff]
  %v725 = vld [vmem:[%s7 + $0x38] sm:$0xff]
  %v726 = vld [vmem:[%s7 + $0x40] sm:$0xff]
  %v727 = vld [vmem:[%s7 + $0x48] sm:$0xff]
  %v728 = vld [vmem:[%s7 + $0x50] sm:$0xff]
  %v729 = vld [vmem:[%s7 + $0x58] sm:$0xff]
  %v730 = vld [vmem:[%s7 + $0x60] sm:$0xff]
  %v731 = vld [vmem:[%s7 + $0x68] sm:$0xff]
  %v732 = vld [vmem:[%s7 + $0x70] sm:$0xff]
  %v733 = vld [vmem:[%s7 + $0x78] sm:$0xff]
  %v734 = vld [vmem:[%s7 + $0x80] sm:$0xff]
  %v735 = vld [vmem:[%s7 + $0x88] sm:$0xff]
  %v736 = vld [vmem:[%s7 + $0x90] sm:$0xff]
  %v737 = vld [vmem:[%s7 + $0x98] sm:$0xff]
  %v738 = vld [vmem:[%s7 + $0xa0] sm:$0xff]
  %v739 = vld [vmem:[%s7 + $0xa8] sm:$0xff]
  %v740 = vld [vmem:[%s7 + $0xb0] sm:$0xff]
  %v741 = vld [vmem:[%s7 + $0xb8] sm:$0xff]
  %v742 = vld [vmem:[%s7 + $0xc0] sm:$0xff]
  %v743 = vld [vmem:[%s7 + $0xc8] sm:$0xff]
  %v744 = vld [vmem:[%s7 + $0xd0] sm:$0xff]
  %v745 = vld [vmem:[%s7 + $0xd8] sm:$0xff]
  %v746 = vld [vmem:[%s7 + $0xe0] sm:$0x11]
  %v747 = vld [vmem:[%s8] sm:$0x3]
  %v749 = vlaneseq
  %v750 = vshrl.u32 %v749, 7
  %v751 = vsub.s32 0, %v750
  %v752 = vrot.slane %v747, %v751
  %v753 = vlaneseq
  %v754 = vshrl.u32 %v753, 7
  %v755 = vsub.s32 1, %v754
  %v756 = vrot.slane %v747, %v755
  %v788 = vunpack.c.l.b16 %v718
  %v789 = vunpack.c.h.b16 %v718
  %v790 = vunpack.c.l.b16 %v719
  %v791 = vunpack.c.h.b16 %v719
  %v792 = vunpack.c.l.b16 %v720
  %v793 = vunpack.c.h.b16 %v720
  %v794 = vunpack.c.l.b16 %v721
  %v795 = vunpack.c.h.b16 %v721
  %v796 = vunpack.c.l.b16 %v722
  %v797 = vunpack.c.h.b16 %v722
  %v798 = vunpack.c.l.b16 %v723
  %v799 = vunpack.c.h.b16 %v723
  %v800 = vunpack.c.l.b16 %v724
  %v801 = vunpack.c.h.b16 %v724
  %v802 = vunpack.c.l.b16 %v725
  %v803 = vunpack.c.h.b16 %v725
  %v804 = vunpack.c.l.b16 %v726
  %v805 = vunpack.c.h.b16 %v726
  %v806 = vunpack.c.l.b16 %v727
  %v807 = vunpack.c.h.b16 %v727
  %v808 = vunpack.c.l.b16 %v728
  %v809 = vunpack.c.h.b16 %v728
  %v810 = vunpack.c.l.b16 %v729
  %v811 = vunpack.c.h.b16 %v729
  %v812 = vunpack.c.l.b16 %v730
  %v813 = vunpack.c.h.b16 %v730
  %v814 = vunpack.c.l.b16 %v731
  %v815 = vunpack.c.h.b16 %v731
  %v816 = vunpack.c.l.b16 %v732
  %v817 = vunpack.c.h.b16 %v732
  %v818 = vunpack.c.l.b16 %v733
  %v819 = vunpack.c.h.b16 %v733
  %v820 = vunpack.c.l.b16 %v734
  %v821 = vunpack.c.h.b16 %v734
  %v822 = vunpack.c.l.b16 %v735
  %v823 = vunpack.c.h.b16 %v735
  %v824 = vunpack.c.l.b16 %v736
  %v825 = vunpack.c.h.b16 %v736
  %v826 = vunpack.c.l.b16 %v737
  %v827 = vunpack.c.h.b16 %v737
  %v828 = vunpack.c.l.b16 %v738
  %v829 = vunpack.c.h.b16 %v738
  %v830 = vunpack.c.l.b16 %v739
  %v831 = vunpack.c.h.b16 %v739
  %v832 = vunpack.c.l.b16 %v740
  %v833 = vunpack.c.h.b16 %v740
  %v834 = vunpack.c.l.b16 %v741
  %v835 = vunpack.c.h.b16 %v741
  %v836 = vunpack.c.l.b16 %v742
  %v837 = vunpack.c.h.b16 %v742
  %v838 = vunpack.c.l.b16 %v743
  %v839 = vunpack.c.h.b16 %v743
  %v840 = vunpack.c.l.b16 %v744
  %v841 = vunpack.c.h.b16 %v744
  %v842 = vunpack.c.l.b16 %v745
  %v843 = vunpack.c.h.b16 %v745
  %v844 = vunpack.c.l.b16 %v746
  %v845 = vunpack.c.h.b16 %v746
  %v846 = vpack.c.b16 %v790, %v788
  %v847 = vpack.c.b16 %v791, %v789
  %v848 = vpack.c.b16 %v794, %v792
  %v849 = vpack.c.b16 %v795, %v793
  %v850 = vpack.c.b16 %v798, %v796
  %v851 = vpack.c.b16 %v799, %v797
  %v852 = vpack.c.b16 %v802, %v800
  %v853 = vpack.c.b16 %v803, %v801
  %v854 = vpack.c.b16 %v806, %v804
  %v855 = vpack.c.b16 %v807, %v805
  %v856 = vpack.c.b16 %v810, %v808
  %v857 = vpack.c.b16 %v811, %v809
  %v858 = vpack.c.b16 %v814, %v812
  %v859 = vpack.c.b16 %v815, %v813
  %v860 = vpack.c.b16 %v818, %v816
  %v861 = vpack.c.b16 %v819, %v817
  %v862 = vpack.c.b16 %v822, %v820
  %v863 = vpack.c.b16 %v823, %v821
  %v864 = vpack.c.b16 %v826, %v824
  %v865 = vpack.c.b16 %v827, %v825
  %v866 = vpack.c.b16 %v830, %v828
  %v867 = vpack.c.b16 %v831, %v829
  %v868 = vpack.c.b16 %v834, %v832
  %v869 = vpack.c.b16 %v835, %v833
  %v870 = vpack.c.b16 %v838, %v836
  %v871 = vpack.c.b16 %v839, %v837
  %v872 = vpack.c.b16 %v842, %v840
  %v873 = vpack.c.b16 %v843, %v841
  %v874 = vpack.c.b16 %v844, %v844
  %v875 = vpack.c.b16 %v845, %v845
  %vm904 = vcmask 793600
  %v906 = vsel %vm904, %v717, 0
  %vm908 = vcmask 1040384
  %v909 = vsel 0, 4294967295, 65535
  %v910 = vsel %vm908, %v909, 0
  %v912 = vand.u32 %v874, %v910
  %v915 = vand.u32 %v875, %v910
  %917 = vmatprep.subr.bf16.mxu0 %v847
  %918 = vmatpush1.bf16.msra.mxu0 %v846
  %919 = vmatprep.subr.bf16.mxu0 %v849
  %920 = vmatpush1.bf16.msra.mxu0 %v848
  %921 = vmatprep.subr.bf16.mxu0 %v851
  %922 = vmatpush1.bf16.msra.mxu0 %v850
  %923 = vmatprep.subr.bf16.mxu0 %v853
  %924 = vmatpush1.bf16.msra.mxu0 %v852
  %925 = vmatprep.subr.bf16.mxu0 %v855
  %926 = vmatpush1.bf16.msra.mxu0 %v854
  %927 = vmatprep.subr.bf16.mxu0 %v857
  %928 = vmatpush1.bf16.msra.mxu0 %v856
  %929 = vmatprep.subr.bf16.mxu0 %v859
  %930 = vmatpush1.bf16.msra.mxu0 %v858
  %931 = vmatprep.subr.bf16.mxu0 %v861
  %932 = vmatpush1.bf16.msra.mxu0 %v860
  %933 = vmatprep.subr.bf16.mxu0 %v863
  %934 = vmatpush1.bf16.msra.mxu0 %v862
  %935 = vmatprep.subr.bf16.mxu0 %v865
  %936 = vmatpush1.bf16.msra.mxu0 %v864
  %937 = vmatprep.subr.bf16.mxu0 %v867
  %938 = vmatpush1.bf16.msra.mxu0 %v866
  %939 = vmatprep.subr.bf16.mxu0 %v869
  %940 = vmatpush1.bf16.msra.mxu0 %v868
  %941 = vmatprep.subr.bf16.mxu0 %v871
  %942 = vmatpush1.bf16.msra.mxu0 %v870
  %943 = vmatprep.subr.bf16.mxu0 %v873
  %944 = vmatpush1.bf16.msra.mxu0 %v872
  %945 = vmatprep.subr.bf16.mxu0 %v915
  %946 = vmatpush1.bf16.msra.mxu0 %v912
  %947 = vmatprep.subr.bf16.mxu0 0
  %948 = vmatpush1.bf16.msra.mxu0 0
  %949 = vmatprep.mubr.bf16.mxu0 %v906
  %950 = vmatmul.mubr.bf16.gmra.mrb[0].mxu0 %v716
  %v951 = vpop.f32.mrb[0].mxu0
  %v952 = vadd.f32 %v752, %v951
  %v953 = vpop.f32.mrb[0].mxu0
  %v954 = vadd.f32 %v756, %v953
  %v955 = vpop.f32.mrb[0].mxu0
  %v956 = vpop.f32.mrb[0].mxu0
  %957 = vdwg.mxu0
  %v958 = vmax.f32 %v952, 0.0
  %v959 = vmax.f32 %v954, 0.0
  %v960 = vpack.c.bf16 %v958, %v958
  %v961 = vpack.c.bf16 %v959, %v959
  %v962 = vld [vmem:[%s9] sm:$0xff]
  %v963 = vld [vmem:[%s9 + $0x8] sm:$0xff]
  %v964 = vld [vmem:[%s9 + $0x10] sm:$0xff]
  %v965 = vld [vmem:[%s9 + $0x18] sm:$0xff]
  %v966 = vld [vmem:[%s9 + $0x20] sm:$0xff]
  %v967 = vld [vmem:[%s9 + $0x28] sm:$0xff]
  %v968 = vld [vmem:[%s9 + $0x30] sm:$0xff]
  %v969 = vld [vmem:[%s9 + $0x38] sm:$0xff]
  %v970 = vld [vmem:[%s9 + $0x40] sm:$0xff]
  %v971 = vld [vmem:[%s9 + $0x48] sm:$0xff]
  %v972 = vld [vmem:[%s9 + $0x50] sm:$0xff]
  %v973 = vld [vmem:[%s9 + $0x58] sm:$0xff]
  %v974 = vld [vmem:[%s9 + $0x60] sm:$0xff]
  %v975 = vld [vmem:[%s9 + $0x68] sm:$0xff]
  %v976 = vld [vmem:[%s9 + $0x70] sm:$0xff]
  %v977 = vld [vmem:[%s9 + $0x78] sm:$0xff]
  %v978 = vld [vmem:[%s9 + $0x80] sm:$0xff]
  %v979 = vld [vmem:[%s9 + $0x88] sm:$0xff]
  %v980 = vld [vmem:[%s9 + $0x90] sm:$0xff]
  %v981 = vld [vmem:[%s9 + $0x98] sm:$0xff]
  %v982 = vld [vmem:[%s9 + $0xa0] sm:$0xff]
  %v983 = vld [vmem:[%s9 + $0xa8] sm:$0xff]
  %v984 = vld [vmem:[%s9 + $0xb0] sm:$0xff]
  %v985 = vld [vmem:[%s9 + $0xb8] sm:$0xff]
  %v986 = vld [vmem:[%s9 + $0xc0] sm:$0xff]
  %v987 = vld [vmem:[%s10] sm:$0x3]
  %v989 = vlaneseq
  %v990 = vshrl.u32 %v989, 7
  %v991 = vsub.s32 0, %v990
  %v992 = vrot.slane %v987, %v991
  %v993 = vlaneseq
  %v994 = vshrl.u32 %v993, 7
  %v995 = vsub.s32 1, %v994
  %v996 = vrot.slane %v987, %v995
  %v1024 = vunpack.c.l.b16 %v962
  %v1025 = vunpack.c.h.b16 %v962
  %v1026 = vunpack.c.l.b16 %v963
  %v1027 = vunpack.c.h.b16 %v963
  %v1028 = vunpack.c.l.b16 %v964
  %v1029 = vunpack.c.h.b16 %v964
  %v1030 = vunpack.c.l.b16 %v965
  %v1031 = vunpack.c.h.b16 %v965
  %v1032 = vunpack.c.l.b16 %v966
  %v1033 = vunpack.c.h.b16 %v966
  %v1034 = vunpack.c.l.b16 %v967
  %v1035 = vunpack.c.h.b16 %v967
  %v1036 = vunpack.c.l.b16 %v968
  %v1037 = vunpack.c.h.b16 %v968
  %v1038 = vunpack.c.l.b16 %v969
  %v1039 = vunpack.c.h.b16 %v969
  %v1040 = vunpack.c.l.b16 %v970
  %v1041 = vunpack.c.h.b16 %v970
  %v1042 = vunpack.c.l.b16 %v971
  %v1043 = vunpack.c.h.b16 %v971
  %v1044 = vunpack.c.l.b16 %v972
  %v1045 = vunpack.c.h.b16 %v972
  %v1046 = vunpack.c.l.b16 %v973
  %v1047 = vunpack.c.h.b16 %v973
  %v1048 = vunpack.c.l.b16 %v974
  %v1049 = vunpack.c.h.b16 %v974
  %v1050 = vunpack.c.l.b16 %v975
  %v1051 = vunpack.c.h.b16 %v975
  %v1052 = vunpack.c.l.b16 %v976
  %v1053 = vunpack.c.h.b16 %v976
  %v1054 = vunpack.c.l.b16 %v977
  %v1055 = vunpack.c.h.b16 %v977
  %v1056 = vunpack.c.l.b16 %v978
  %v1057 = vunpack.c.h.b16 %v978
  %v1058 = vunpack.c.l.b16 %v979
  %v1059 = vunpack.c.h.b16 %v979
  %v1060 = vunpack.c.l.b16 %v980
  %v1061 = vunpack.c.h.b16 %v980
  %v1062 = vunpack.c.l.b16 %v981
  %v1063 = vunpack.c.h.b16 %v981
  %v1064 = vunpack.c.l.b16 %v982
  %v1065 = vunpack.c.h.b16 %v982
  %v1066 = vunpack.c.l.b16 %v983
  %v1067 = vunpack.c.h.b16 %v983
  %v1068 = vunpack.c.l.b16 %v984
  %v1069 = vunpack.c.h.b16 %v984
  %v1070 = vunpack.c.l.b16 %v985
  %v1071 = vunpack.c.h.b16 %v985
  %v1072 = vunpack.c.l.b16 %v986
  %v1073 = vunpack.c.h.b16 %v986
  %v1074 = vpack.c.b16 %v1026, %v1024
  %v1075 = vpack.c.b16 %v1027, %v1025
  %v1076 = vpack.c.b16 %v1030, %v1028
  %v1077 = vpack.c.b16 %v1031, %v1029
  %v1078 = vpack.c.b16 %v1034, %v1032
  %v1079 = vpack.c.b16 %v1035, %v1033
  %v1080 = vpack.c.b16 %v1038, %v1036
  %v1081 = vpack.c.b16 %v1039, %v1037
  %v1082 = vpack.c.b16 %v1042, %v1040
  %v1083 = vpack.c.b16 %v1043, %v1041
  %v1084 = vpack.c.b16 %v1046, %v1044
  %v1085 = vpack.c.b16 %v1047, %v1045
  %v1086 = vpack.c.b16 %v1050, %v1048
  %v1087 = vpack.c.b16 %v1051, %v1049
  %v1088 = vpack.c.b16 %v1054, %v1052
  %v1089 = vpack.c.b16 %v1055, %v1053
  %v1090 = vpack.c.b16 %v1058, %v1056
  %v1091 = vpack.c.b16 %v1059, %v1057
  %v1092 = vpack.c.b16 %v1062, %v1060
  %v1093 = vpack.c.b16 %v1063, %v1061
  %v1094 = vpack.c.b16 %v1066, %v1064
  %v1095 = vpack.c.b16 %v1067, %v1065
  %v1096 = vpack.c.b16 %v1070, %v1068
  %v1097 = vpack.c.b16 %v1071, %v1069
  %v1098 = vpack.c.b16 %v1072, %v1072
  %v1099 = vpack.c.b16 %v1073, %v1073
  %vm1124 = vcmask 588800
  %v1126 = vsel %vm1124, %v961, 0
  %v1129 = vsel %vm152, %v1098, 0
  %v1132 = vsel %vm152, %v1099, 0
  %1134 = vmatprep.subr.bf16.mxu0 %v1075
  %1135 = vmatpush1.bf16.msra.mxu0 %v1074
  %1136 = vmatprep.subr.bf16.mxu0 %v1077
  %1137 = vmatpush1.bf16.msra.mxu0 %v1076
  %1138 = vmatprep.subr.bf16.mxu0 %v1079
  %1139 = vmatpush1.bf16.msra.mxu0 %v1078
  %1140 = vmatprep.subr.bf16.mxu0 %v1081
  %1141 = vmatpush1.bf16.msra.mxu0 %v1080
  %1142 = vmatprep.subr.bf16.mxu0 %v1083
  %1143 = vmatpush1.bf16.msra.mxu0 %v1082
  %1144 = vmatprep.subr.bf16.mxu0 %v1085
  %1145 = vmatpush1.bf16.msra.mxu0 %v1084
  %1146 = vmatprep.subr.bf16.mxu0 %v1087
  %1147 = vmatpush1.bf16.msra.mxu0 %v1086
  %1148 = vmatprep.subr.bf16.mxu0 %v1089
  %1149 = vmatpush1.bf16.msra.mxu0 %v1088
  %1150 = vmatprep.subr.bf16.mxu0 %v1091
  %1151 = vmatpush1.bf16.msra.mxu0 %v1090
  %1152 = vmatprep.subr.bf16.mxu0 %v1093
  %1153 = vmatpush1.bf16.msra.mxu0 %v1092
  %1154 = vmatprep.subr.bf16.mxu0 %v1095
  %1155 = vmatpush1.bf16.msra.mxu0 %v1094
  %1156 = vmatprep.subr.bf16.mxu0 %v1097
  %1157 = vmatpush1.bf16.msra.mxu0 %v1096
  %1158 = vmatprep.subr.bf16.mxu0 %v1132
  %1159 = vmatpush1.bf16.msra.mxu0 %v1129
  %1160 = vmatprep.subr.bf16.mxu0 0
  %1161 = vmatpush1.bf16.msra.mxu0 0
  %1162 = vmatprep.subr.bf16.mxu0 0
  %1163 = vmatpush1.bf16.msra.mxu0 0
  %1164 = vmatprep.subr.bf16.mxu0 0
  %1165 = vmatpush1.bf16.msra.mxu0 0
  %1166 = vmatprep.mubr.bf16.mxu0 %v1126
  %1167 = vmatmul.mubr.bf16.gmra.mrb[0].mxu0 %v960
  %v1168 = vpop.f32.mrb[0].mxu0
  %v1169 = vadd.f32 %v992, %v1168
  %v1170 = vpop.f32.mrb[0].mxu0
  %v1171 = vadd.f32 %v996, %v1170
  %v1172 = vpop.f32.mrb[0].mxu0
  %v1173 = vpop.f32.mrb[0].mxu0
  %1174 = vdwg.mxu0
  %v1175 = vmax.f32 %v1169, 0.0
  %v1176 = vmax.f32 %v1171, 0.0
  %v1177 = vpack.c.bf16 %v1175, %v1175
  %v1178 = vpack.c.bf16 %v1176, %v1176
  %v1179 = vld [vmem:[%s11] sm:$0xf]
  %v1180 = vld [vmem:[%s11 + $0x4] sm:$0xf]
  %v1181 = vld [vmem:[%s11 + $0x8] sm:$0xf]
  %v1182 = vld [vmem:[%s11 + $0xc] sm:$0xf]
  %v1183 = vld [vmem:[%s11 + $0x10] sm:$0xf]
  %v1184 = vld [vmem:[%s11 + $0x14] sm:$0xf]
  %v1185 = vld [vmem:[%s11 + $0x18] sm:$0xf]
  %v1186 = vld [vmem:[%s11 + $0x1c] sm:$0xf]
  %v1187 = vld [vmem:[%s11 + $0x20] sm:$0xf]
  %v1188 = vld [vmem:[%s11 + $0x24] sm:$0xf]
  %v1189 = vld [vmem:[%s11 + $0x28] sm:$0xf]
  %v1190 = vld [vmem:[%s11 + $0x2c] sm:$0xf]
  %v1191 = vld [vmem:[%s11 + $0x30] sm:$0xf]
  %v1192 = vld [vmem:[%s11 + $0x34] sm:$0xf]
  %v1193 = vld [vmem:[%s11 + $0x38] sm:$0xf]
  %v1194 = vld [vmem:[%s11 + $0x3c] sm:$0xf]
  %v1195 = vld [vmem:[%s11 + $0x40] sm:$0xf]
  %v1196 = vld [vmem:[%s11 + $0x44] sm:$0xf]
  %v1197 = vld [vmem:[%s11 + $0x48] sm:$0xf]
  %v1198 = vld [vmem:[%s11 + $0x4c] sm:$0xf]
  %v1199 = vld [vmem:[%s11 + $0x50] sm:$0xf]
  %v1200 = vld [vmem:[%s11 + $0x54] sm:$0xf]
  %v1201 = vld [vmem:[%s12] sm:$0x1]
  %v1203 = vlaneseq
  %v1204 = vshrl.u32 %v1203, 7
  %v1205 = vsub.s32 0, %v1204
  %v1206 = vrot.slane %v1201, %v1205
  %v1230 = vunpack.c.l.b16 %v1179
  %v1231 = vunpack.c.l.b16 %v1180
  %v1232 = vunpack.c.l.b16 %v1181
  %v1233 = vunpack.c.l.b16 %v1182
  %v1234 = vunpack.c.l.b16 %v1183
  %v1235 = vunpack.c.l.b16 %v1184
  %v1236 = vunpack.c.l.b16 %v1185
  %v1237 = vunpack.c.l.b16 %v1186
  %v1238 = vunpack.c.l.b16 %v1187
  %v1239 = vunpack.c.l.b16 %v1188
  %v1240 = vunpack.c.l.b16 %v1189
  %v1241 = vunpack.c.l.b16 %v1190
  %v1242 = vunpack.c.l.b16 %v1191
  %v1243 = vunpack.c.l.b16 %v1192
  %v1244 = vunpack.c.l.b16 %v1193
  %v1245 = vunpack.c.l.b16 %v1194
  %v1246 = vunpack.c.l.b16 %v1195
  %v1247 = vunpack.c.l.b16 %v1196
  %v1248 = vunpack.c.l.b16 %v1197
  %v1249 = vunpack.c.l.b16 %v1198
  %v1250 = vunpack.c.l.b16 %v1199
  %v1251 = vunpack.c.l.b16 %v1200
  %v1252 = vpack.c.b16 %v1231, %v1230
  %v1253 = vpack.c.b16 %v1233, %v1232
  %v1254 = vpack.c.b16 %v1235, %v1234
  %v1255 = vpack.c.b16 %v1237, %v1236
  %v1256 = vpack.c.b16 %v1239, %v1238
  %v1257 = vpack.c.b16 %v1241, %v1240
  %v1258 = vpack.c.b16 %v1243, %v1242
  %v1259 = vpack.c.b16 %v1245, %v1244
  %v1260 = vpack.c.b16 %v1247, %v1246
  %v1261 = vpack.c.b16 %v1249, %v1248
  %v1262 = vpack.c.b16 %v1251, %v1250
  %vm1273 = vcmask 384000
  %v1275 = vsel %vm1273, %v1178, 0
  %vm1277 = vcmask 1046528
  %vm1278 = vcmask 1047552
  %v1279 = vsel %vm1277, 4294967295, 65535
  %v1280 = vsel %vm1278, %v1279, 0
  %v1282 = vand.u32 %v1262, %v1280
  %1284 = vmatprep.subr.bf16.mxu0 0
  %1285 = vmatpush1.bf16.msra.mxu0 %v1252
  %1286 = vmatprep.subr.bf16.mxu0 0
  %1287 = vmatpush1.bf16.msra.mxu0 %v1253
  %1288 = vmatprep.subr.bf16.mxu0 0
  %1289 = vmatpush1.bf16.msra.mxu0 %v1254
  %1290 = vmatprep.subr.bf16.mxu0 0
  %1291 = vmatpush1.bf16.msra.mxu0 %v1255
  %1292 = vmatprep.subr.bf16.mxu0 0
  %1293 = vmatpush1.bf16.msra.mxu0 %v1256
  %1294 = vmatprep.subr.bf16.mxu0 0
  %1295 = vmatpush1.bf16.msra.mxu0 %v1257
  %1296 = vmatprep.subr.bf16.mxu0 0
  %1297 = vmatpush1.bf16.msra.mxu0 %v1258
  %1298 = vmatprep.subr.bf16.mxu0 0
  %1299 = vmatpush1.bf16.msra.mxu0 %v1259
  %1300 = vmatprep.subr.bf16.mxu0 0
  %1301 = vmatpush1.bf16.msra.mxu0 %v1260
  %1302 = vmatprep.subr.bf16.mxu0 0
  %1303 = vmatpush1.bf16.msra.mxu0 %v1261
  %1304 = vmatprep.subr.bf16.mxu0 0
  %1305 = vmatpush1.bf16.msra.mxu0 %v1282
  %1306 = vmatprep.subr.bf16.mxu0 0
  %1307 = vmatpush1.bf16.msra.mxu0 0
  %1308 = vmatprep.subr.bf16.mxu0 0
  %1309 = vmatpush1.bf16.msra.mxu0 0
  %1310 = vmatprep.subr.bf16.mxu0 0
  %1311 = vmatpush1.bf16.msra.mxu0 0
  %1312 = vmatprep.subr.bf16.mxu0 0
  %1313 = vmatpush1.bf16.msra.mxu0 0
  %1314 = vmatprep.subr.bf16.mxu0 0
  %1315 = vmatpush1.bf16.msra.mxu0 0
  %1316 = vmatprep.mubr.bf16.mxu0 %v1275
  %1317 = vmatmul.mubr.bf16.gmra.mrb[0].mxu0 %v1177
  %v1318 = vpop.f32.mrb[0].mxu0
  %v1319 = vadd.f32 %v1206, %v1318
  %v1320 = vpop.f32.mrb[0].mxu0
  %v1321 = vpop.f32.mrb[0].mxu0
  %v1322 = vpop.f32.mrb[0].mxu0
  %1323 = vdwg.mxu0
  %v1324 = vmax.f32 %v1319, 0.0
  %vm1325 = vcmask 812032
  %1326 = vst.msk [vmem:[%s13] sm:$0x3] %vm1325, %v1324
  // Predicated region
  $region54: #{dlcm_hex_8_7_forward.1} parent=0 // pred_check
    _
  $region55: #{dlcm_hex_8_7_forward.1} parent=0 // pred_check_branch
    %1328 = sbr.rel (0) target = $region57
  $region56: #{dlcm_hex_8_7_forward.1} parent=0 // pred_region
    _
  $region57: #{dlcm_hex_8_7_forward.1} parent=0 // pred_fallthru
    _
  // Predicated region
  $region58: #{dlcm_hex_8_7_forward.1} parent=0 // pred_check
    _
  $region59: #{dlcm_hex_8_7_forward.1} parent=0 // pred_check_branch
    %1330 = sbr.rel (0) target = $region61
  $region60: #{dlcm_hex_8_7_forward.1} parent=0 // pred_region
    _
  $region61: #{dlcm_hex_8_7_forward.1} parent=0 // pred_fallthru
    _

</llo_original>
